<compile_context>
chip_gen: v6e
topology: v6e:2x2x1
jax: 0.10.0
libtpu: 0.0.40
codegen_flags: <defaults>
</compile_context>

<pallas_src>
import functools

import jax
import jax.numpy as jnp
from jax.experimental import pallas as pl
from jax.experimental.pallas import tpu as pltpu


def _round_up(x, m):
    return (x + m - 1) // m * m


def _vmem_capacity_bytes():
    """Physical VMEM per core; conservative 64 MiB (v7x) if the query fails."""
    try:
        return int(pltpu.get_tpu_info().vmem_capacity_bytes)
    except Exception:
        return 64 * 1024 * 1024


# --------------------------------------------------------------------------
# Kernels
# --------------------------------------------------------------------------
def _ffn_resident_kernel(x_ref, w1_ref, b1_ref, w2_ref, b2_ref, o_ref):
    """Whole FFN for one token tile; w1/w2 fully resident in VMEM."""
    h = jnp.dot(x_ref[...], w1_ref[...], preferred_element_type=jnp.float32)
    h = jnp.maximum(h + b1_ref[...].astype(jnp.float32), 0.0)
    # TODO(synk): training-mode dropout (pltpu.prng_seed + stateful_bernoulli)
    # not wired in; module is evaluated in eval mode (dropout == identity).
    y = jnp.dot(h.astype(w2_ref.dtype), w2_ref[...],
                preferred_element_type=jnp.float32)
    o_ref[...] = (y + b2_ref[...].astype(jnp.float32)).astype(o_ref.dtype)


def _ffn_chunked_f32_kernel(x_ref, w1_ref, b1_ref, w2_ref, b2_ref, o_ref):
    """d_ff-chunked FFN, f32 output: accumulate directly into the resident o_ref."""
    k = pl.program_id(1)

    @pl.when(k == 0)
    def _init():
        # Fold the second bias into the accumulator init.
        o_ref[...] = jnp.broadcast_to(b2_ref[...].astype(o_ref.dtype), o_ref.shape)

    h = jnp.dot(x_ref[...], w1_ref[...], preferred_element_type=jnp.float32)
    h = jnp.maximum(h + b1_ref[...].astype(jnp.float32), 0.0)
    o_ref[...] += jnp.dot(h.astype(w2_ref.dtype), w2_ref[...],
                          preferred_element_type=jnp.float32)


def _ffn_chunked_acc_kernel(x_ref, w1_ref, b1_ref, w2_ref, b2_ref, o_ref, acc_ref):
    """d_ff-chunked FFN, sub-f32 output: f32 scratch accumulator + final cast."""
    k = pl.program_id(1)

    @pl.when(k == 0)
    def _init():
        acc_ref[...] = jnp.broadcast_to(
            b2_ref[...].astype(jnp.float32), acc_ref.shape)

    h = jnp.dot(x_ref[...], w1_ref[...], preferred_element_type=jnp.float32)
    h = jnp.maximum(h + b1_ref[...].astype(jnp.float32), 0.0)
    acc_ref[...] += jnp.dot(h.astype(w2_ref.dtype), w2_ref[...],
                            preferred_element_type=jnp.float32)

    @pl.when(k == pl.num_programs(1) - 1)
    def _finalize():
        o_ref[...] = acc_ref[...].astype(o_ref.dtype)


# --------------------------------------------------------------------------
# Wrapper
# --------------------------------------------------------------------------
@functools.partial(jax.jit, static_argnames=("block_m", "block_f"))
def positionwise_ffn(x, w1, b1, w2, b2, *, block_m=None, block_f=None):
    """x: [M, d_model]; w1: [d_model, d_ff]; b1: [d_ff]; w2: [d_ff, d_model]; b2: [d_model]."""
    M, d_model = x.shape
    d_ff = w1.shape[1]

    vmem_cap = _vmem_capacity_bytes()
    budget = int(0.75 * vmem_cap)            # leave headroom for compiler scratch

    d_mp = _round_up(d_model, 128)           # lane-dense feature dims
    x_bytes = x.dtype.itemsize
    w_bytes = w1.dtype.itemsize
    out_bytes = x_bytes
    out_is_f32 = (x.dtype == jnp.float32)
    acc_bytes = 0 if out_is_f32 else 4       # scratch only for sub-f32 outputs

    # Target token tile: v5e/v6e (>=128 MiB VMEM) amortize weight streaming
    # further than v7x (64 MiB).
    bm_target = block_m if block_m is not None else (
        1024 if vmem_cap > 80 * 1024 * 1024 else 512)
    bm = min(bm_target, _round_up(M, 8))

    # ----- resident-weights fast path: weights fit in VMEM -> no d_ff axis -----
    d_fp_res = _round_up(d_ff, 128)
    w_resident_bytes = 2 * d_mp * d_fp_res * w_bytes + (d_fp_res + d_mp) * 4

    def resident_tile_bytes(bm_):
        return (2 * bm_ * d_mp * (x_bytes + out_bytes)   # x / out double-buffered
                + bm_ * d_fp_res * 4                     # h intermediate (f32)
                + bm_ * d_mp * 4)                        # f32 result tile

    use_resident = (block_f is None and
                    w_resident_bytes + resident_tile_bytes(min(bm, 256)) <= budget)

    if use_resident:
        # Keep >= 2 parallel token tiles so both v7x TensorCores get work.
        if M > 256:
            while bm > 128 and (M + bm - 1) // bm < 2:
                bm = _round_up(bm // 2, 8)
        # Shrink until the working set fits the budget.
        while bm > 8 and w_resident_bytes + resident_tile_bytes(bm) > budget:
            bm = max(8, _round_up(bm // 2, 8))
        bf = d_fp_res                     # unused for tiling; full width resident
        d_fp = d_fp_res
        vmem_est = w_resident_bytes + resident_tile_bytes(bm)
    else:
        # ----- chunked path: stream w1/w2 in d_ff chunks, f32 accumulation -----
        bf = block_f if block_f is not None else (
            512 if vmem_cap > 80 * 1024 * 1024 else 256)
        bf = max(128, min(bf, _round_up(d_ff, 128)))
        if bf >= 256 and d_ff >= 512:
            bf = (bf // 256) * 256        # full MXU reduction tiles (2x256 MXU)

        if M > 256:
            while bm > 128 and (M + bm - 1) // bm < 2:
                bm = _round_up(bm // 2, 8)

        def chunked_tile_bytes(bm_, bf_):
            return (2 * bm_ * d_mp * x_bytes       # x tiles (double-buffered)
                    + 2 * d_mp * bf_ * w_bytes     # w1 chunks
                    + 2 * bf_ * d_mp * w_bytes     # w2 chunks
                    + 2 * bm_ * d_mp * out_bytes   # out tiles
                    + bm_ * d_mp * acc_bytes       # f32 scratch (bf16 out only)
                    + bm_ * bf_ * 4                # h chunk
                    + 2 * (bf_ + d_mp) * 4)        # biases

        while chunked_tile_bytes(bm, bf) > budget and bm > 256:
            bm = _round_up(bm // 2, 8)
        while chunked_tile_bytes(bm, bf) > budget and bf > 128:
            bf = max(128, (bf // 2) // 128 * 128)

        d_fp = _round_up(d_ff, bf)
        vmem_est = chunked_tile_bytes(bm, bf)

    vmem_limit = int(min(max(32 * 1024 * 1024, vmem_est + 8 * 1024 * 1024),
                         int(0.9 * vmem_cap)))

    # ----- padding (guarded: no-op copies avoided for 128-multiple dims) -----
    Mp = _round_up(M, bm)
    xp = x if (Mp == M and d_mp == d_model) else jnp.pad(
        x, ((0, Mp - M), (0, d_mp - d_model)))
    w1p = w1 if (d_mp == d_model and d_fp == d_ff) else jnp.pad(
        w1, ((0, d_mp - d_model), (0, d_fp - d_ff)))
    b1p = (b1 if d_fp == d_ff else jnp.pad(b1, (0, d_fp - d_ff))).reshape(1, d_fp)
    w2p = w2 if (d_fp == d_ff and d_mp == d_model) else jnp.pad(
        w2, ((0, d_fp - d_ff), (0, d_mp - d_model)))
    b2p = (b2 if d_mp == d_model else jnp.pad(b2, (0, d_mp - d_model))).reshape(1, d_mp)

    num_m = Mp // bm
    flops = 4 * Mp * d_mp * d_fp

    if use_resident:
        cost = pl.CostEstimate(
            flops=flops, transcendentals=0,
            bytes_accessed=(xp.size * x_bytes + w1p.size * w_bytes
                            + w2p.size * w_bytes + Mp * d_mp * out_bytes))
        out = pl.pallas_call(
            _ffn_resident_kernel,
            out_shape=jax.ShapeDtypeStruct((Mp, d_mp), x.dtype),
            grid_spec=pltpu.PrefetchScalarGridSpec(
                num_scalar_prefetch=0,
                grid=(num_m,),
                in_specs=[
                    pl.BlockSpec((bm, d_mp), lambda i: (i, 0)),     # x tile
                    pl.BlockSpec((d_mp, d_fp), lambda i: (0, 0)),   # w1 (resident)
                    pl.BlockSpec((1, d_fp), lambda i: (0, 0)),      # b1
                    pl.BlockSpec((d_fp, d_mp), lambda i: (0, 0)),   # w2 (resident)
                    pl.BlockSpec((1, d_mp), lambda i: (0, 0)),      # b2
                ],
                out_specs=pl.BlockSpec((bm, d_mp), lambda i: (i, 0)),
            ),
            compiler_params=pltpu.CompilerParams(
                dimension_semantics=("parallel",),
                vmem_limit_bytes=vmem_limit),
            cost_estimate=cost,
        )(xp, w1p, b1p, w2p, b2p)
    else:
        num_k = d_fp // bf
        kernel = _ffn_chunked_f32_kernel if out_is_f32 else _ffn_chunked_acc_kernel
        scratch = [] if out_is_f32 else [pltpu.VMEM((bm, d_mp), jnp.float32)]
        cost = pl.CostEstimate(
            flops=flops, transcendentals=0,
            bytes_accessed=(xp.size * x_bytes
                            + num_m * (w1p.size + w2p.size) * w_bytes  # re-streamed
                            + Mp * d_mp * out_bytes))
        out = pl.pallas_call(
            kernel,
            out_shape=jax.ShapeDtypeStruct((Mp, d_mp), x.dtype),
            grid_spec=pltpu.PrefetchScalarGridSpec(
                num_scalar_prefetch=0,
                grid=(num_m, num_k),
                in_specs=[
                    pl.BlockSpec((bm, d_mp), lambda i, k: (i, 0)),   # x tile
                    pl.BlockSpec((d_mp, bf), lambda i, k: (0, k)),   # w1 chunk
                    pl.BlockSpec((1, bf), lambda i, k: (0, k)),      # b1 chunk
                    pl.BlockSpec((bf, d_mp), lambda i, k: (k, 0)),   # w2 chunk
                    pl.BlockSpec((1, d_mp), lambda i, k: (0, 0)),    # b2
                ],
                out_specs=pl.BlockSpec((bm, d_mp), lambda i, k: (i, 0)),
                scratch_shapes=scratch,
            ),
            compiler_params=pltpu.CompilerParams(
                dimension_semantics=("parallel", "arbitrary"),
                vmem_limit_bytes=vmem_limit),
            cost_estimate=cost,
        )(xp, w1p, b1p, w2p, b2p)

    return out[:M, :d_model]


def init_params(key, d_model, d_ff, dtype=jnp.float32):
    """Deterministic init mimicking nn.Linear default (uniform +/- 1/sqrt(fan_in))."""
    k1, k2, k3, k4 = jax.random.split(key, 4)
    bound1 = 1.0 / (d_model ** 0.5)
    bound2 = 1.0 / (d_ff ** 0.5)
    # stored transposed relative to PyTorch (out_features, in_features)
    w1 = jax.random.uniform(k1, (d_model, d_ff), dtype, -bound1, bound1)
    b1 = jax.random.uniform(k2, (d_ff,), dtype, -bound1, bound1)
    w2 = jax.random.uniform(k3, (d_ff, d_model), dtype, -bound2, bound2)
    b2 = jax.random.uniform(k4, (d_model,), dtype, -bound2, bound2)
    return w1, b1, w2, b2


if __name__ == "__main__":
    key = jax.random.PRNGKey(0)
    batch, seq, d_model, d_ff = 2, 8, 32, 64

    kx, kp = jax.random.split(key)
    x = jax.random.normal(kx, (batch, seq, d_model), jnp.float32)
    w1, b1, w2, b2 = init_params(kp, d_model, d_ff)

    # Flatten (batch, seq) -> tokens; Linear acts on the last dim.
    x2d = x.reshape(batch * seq, d_model)
    out2d = positionwise_ffn(x2d, w1, b1, w2, b2)
    out = out2d.reshape(batch, seq, d_model)
    jax.block_until_ready(out)

    # Also exercise the chunked (d_ff-tiled) path explicitly.
    out2d_chunked = positionwise_ffn(x2d, w1, b1, w2, b2, block_m=8, block_f=128)
    jax.block_until_ready(out2d_chunked)

    # Reference check in plain JAX (eval-mode dropout == identity).
    ref = jnp.maximum(x2d @ w1 + b1, 0.0) @ w2 + b2
    assert jnp.allclose(out2d, ref, atol=1e-5, rtol=1e-5), "resident path mismatch"
    assert jnp.allclose(out2d_chunked, ref, atol=1e-5, rtol=1e-5), "chunked path mismatch"

    print("KERNEL_OK")
</pallas_src>

<mosaic_0001>
module attributes {stable_mosaic.version = 11 : i64} {
  func.func @_ffn_resident_kernel(%arg0: i32, %arg1: memref<16x128xf32, #tpu.memory_space<vmem>>, %arg2: memref<128x128xf32, #tpu.memory_space<vmem>>, %arg3: memref<1x128xf32, #tpu.memory_space<vmem>>, %arg4: memref<128x128xf32, #tpu.memory_space<vmem>>, %arg5: memref<1x128xf32, #tpu.memory_space<vmem>>, %arg6: memref<16x128xf32, #tpu.memory_space<vmem>>) attributes {dimension_semantics = [#tpu.dimension_semantics<parallel>], iteration_bounds = array<i64: 1>, scalar_prefetch = 0 : i64, scratch_operands = 0 : i64, tpu.core_type = #tpu.core_type<tc>, window_params = [{transform_indices = @transform_0, window_bounds = array<i64: 16, 128>}, {pipeline_mode = #tpu.pipeline_mode<synchronous>, transform_indices = @transform_1, window_bounds = array<i64: 128, 128>}, {pipeline_mode = #tpu.pipeline_mode<synchronous>, transform_indices = @transform_2, window_bounds = array<i64: 1, 128>}, {pipeline_mode = #tpu.pipeline_mode<synchronous>, transform_indices = @transform_3, window_bounds = array<i64: 128, 128>}, {pipeline_mode = #tpu.pipeline_mode<synchronous>, transform_indices = @transform_4, window_bounds = array<i64: 1, 128>}, {transform_indices = @transform_5, window_bounds = array<i64: 16, 128>}]} {
    %c0 = arith.constant 0 : index
    %c0_0 = arith.constant 0 : index
    %0 = vector.load %arg1[%c0, %c0_0] : memref<16x128xf32, #tpu.memory_space<vmem>>, vector<16x128xf32>
    %c0_1 = arith.constant 0 : index
    %c0_2 = arith.constant 0 : index
    %1 = vector.load %arg2[%c0_1, %c0_2] : memref<128x128xf32, #tpu.memory_space<vmem>>, vector<128x128xf32>
    %cst = arith.constant dense<0.000000e+00> : vector<16x128xf32>
    %2 = tpu.matmul %0, %1, %cst {dimension_numbers = #tpu.dot_dimension_numbers<[1], [0], [0], [1], [0, 0, 1, 1], [], []>} : vector<16x128xf32>, vector<128x128xf32>, vector<16x128xf32> -> vector<16x128xf32>
    %c0_3 = arith.constant 0 : index
    %c0_4 = arith.constant 0 : index
    %3 = vector.load %arg3[%c0_3, %c0_4] : memref<1x128xf32, #tpu.memory_space<vmem>>, vector<1x128xf32>
    %4 = vector.broadcast %3 : vector<1x128xf32> to vector<16x128xf32>
    %5 = arith.addf %2, %4 : vector<16x128xf32>
    %cst_5 = arith.constant 0.000000e+00 : f32
    %6 = vector.broadcast %cst_5 : f32 to vector<16x128xf32>
    %7 = arith.maximumf %5, %6 : vector<16x128xf32>
    %c0_6 = arith.constant 0 : index
    %c0_7 = arith.constant 0 : index
    %8 = vector.load %arg4[%c0_6, %c0_7] : memref<128x128xf32, #tpu.memory_space<vmem>>, vector<128x128xf32>
    %cst_8 = arith.constant dense<0.000000e+00> : vector<16x128xf32>
    %9 = tpu.matmul %7, %8, %cst_8 {dimension_numbers = #tpu.dot_dimension_numbers<[1], [0], [0], [1], [0, 0, 1, 1], [], []>} : vector<16x128xf32>, vector<128x128xf32>, vector<16x128xf32> -> vector<16x128xf32>
    %c0_9 = arith.constant 0 : index
    %c0_10 = arith.constant 0 : index
    %10 = vector.load %arg5[%c0_9, %c0_10] : memref<1x128xf32, #tpu.memory_space<vmem>>, vector<1x128xf32>
    %11 = vector.broadcast %10 : vector<1x128xf32> to vector<16x128xf32>
    %12 = arith.addf %9, %11 : vector<16x128xf32>
    %c0_11 = arith.constant 0 : index
    %c0_12 = arith.constant 0 : index
    %13 = vector.load %arg6[%c0_11, %c0_12] : memref<16x128xf32, #tpu.memory_space<vmem>>, vector<16x128xf32>
    tpu.vector_store %arg6[%c0_11, %c0_12], %12 {strides = array<i32>} : memref<16x128xf32, #tpu.memory_space<vmem>>, vector<16x128xf32>,
    return
  }
  func.func @transform_0(%arg0: i32) -> (i32, i32) {
    %c0_i32 = arith.constant 0 : i32
    %c0_i32_0 = arith.constant 0 : i32
    return %arg0, %c0_i32 : i32, i32
  }
  func.func @transform_1(%arg0: i32) -> (i32, i32) {
    %c0_i32 = arith.constant 0 : i32
    %c0_i32_0 = arith.constant 0 : i32
    %c0_i32_1 = arith.constant 0 : i32
    return %c0_i32, %c0_i32_0 : i32, i32
  }
  func.func @transform_2(%arg0: i32) -> (i32, i32) {
    %c0_i32 = arith.constant 0 : i32
    %c0_i32_0 = arith.constant 0 : i32
    %c0_i32_1 = arith.constant 0 : i32
    return %c0_i32, %c0_i32_0 : i32, i32
  }
  func.func @transform_3(%arg0: i32) -> (i32, i32) {
    %c0_i32 = arith.constant 0 : i32
    %c0_i32_0 = arith.constant 0 : i32
    %c0_i32_1 = arith.constant 0 : i32
    return %c0_i32, %c0_i32_0 : i32, i32
  }
  func.func @transform_4(%arg0: i32) -> (i32, i32) {
    %c0_i32 = arith.constant 0 : i32
    %c0_i32_0 = arith.constant 0 : i32
    %c0_i32_1 = arith.constant 0 : i32
    return %c0_i32, %c0_i32_0 : i32, i32
  }
  func.func @transform_5(%arg0: i32) -> (i32, i32) {
    %c0_i32 = arith.constant 0 : i32
    %c0_i32_0 = arith.constant 0 : i32
    return %arg0, %c0_i32 : i32, i32
  }
}

</mosaic_0001>

<llo_original>
// kernel: positionwise_ffn.1
$region0: #{positionwise_ffn.1}
  #allocation0 [shape = 'u32[]', space=smem, size = 0x4, offset = 0x4, fixed_abs, tag = 'smem constant byte address 0x4 - core index']
  #allocation1 [shape = 'u32[144,128]{1,0:T(1,128)}', space=vmem, size = 0x12000, scoped, tag = 'internal scratch']
  %s0 = inlined_call_operand.vmem [shape: f32[16,128], index: 0, kind: input, shape index: {}]
  %s1 = inlined_call_operand.vmem [shape: f32[128,128], index: 1, kind: input, shape index: {}]
  %s2 = inlined_call_operand.vmem [shape: f32[1,128], index: 2, kind: input, shape index: {}]
  %s3 = inlined_call_operand.vmem [shape: f32[128,128], index: 3, kind: input, shape index: {}]
  %s4 = inlined_call_operand.vmem [shape: f32[1,128], index: 4, kind: input, shape index: {}]
  %s5 = inlined_call_operand.hbm [shape: f32[16,128], index: 5, kind: output, shape index: {}]
  %s6 = sld [smem:[#allocation0]]
  $region30: #{positionwise_ffn.1} parent=0
    _
  %s8 = ssub.s32 1, %s6
  %s9 = scalar_select 0, %s8, %s6
  $region1: #{positionwise_ffn.1} parent=0
    #allocation2 [shape = 'u8[8192]{0}', space=vmem, size = 0x2000, scoped, tag = 'output window, operand 0, single buffered']
    #allocation3 [shape = 's32[1]{0}', space=sflag, size = 0x4, scoped, tag = 'scoped memory for positionwise_ffn.1']
    %10 = vsyncpa [#allocation3], 0
    // Predicated region
    $region2: #{positionwise_ffn.1} parent=1 // pred_check
      _
    $region3: #{positionwise_ffn.1} parent=1 // pred_check_branch
      %12 = sbr.rel (0) target = $region5
    $region4: #{positionwise_ffn.1} parent=1 // pred_region
      _
    $region5: #{positionwise_ffn.1} parent=1 // pred_fallthru
      _
    // Predicated region
    $region6: #{positionwise_ffn.1} parent=1 // pred_check
      _
    $region7: #{positionwise_ffn.1} parent=1 // pred_check_branch
      %14 = sbr.rel (0) target = $region9
    $region8: #{positionwise_ffn.1} parent=1 // pred_region
      _
    $region9: #{positionwise_ffn.1} parent=1 // pred_fallthru
      _
    // Predicated region
    $region10: #{positionwise_ffn.1} parent=1 // pred_check
      _
    $region11: #{positionwise_ffn.1} parent=1 // pred_check_branch
      %16 = sbr.rel (0) target = $region13
    $region12: #{positionwise_ffn.1} parent=1 // pred_region
      _
    $region13: #{positionwise_ffn.1} parent=1 // pred_fallthru
      _
    // Predicated region
    $region14: #{positionwise_ffn.1} parent=1 // pred_check
      _
    $region15: #{positionwise_ffn.1} parent=1 // pred_check_branch
      %18 = sbr.rel (0) target = $region17
    $region16: #{positionwise_ffn.1} parent=1 // pred_region
      _
    $region17: #{positionwise_ffn.1} parent=1 // pred_fallthru
      _
    // Predicated region
    $region18: #{positionwise_ffn.1} parent=1 // pred_check
      _
    $region19: #{positionwise_ffn.1} parent=1 // pred_check_branch
      %20 = sbr.rel (0) target = $region21
    $region20: #{positionwise_ffn.1} parent=1 // pred_region
      _
    $region21: #{positionwise_ffn.1} parent=1 // pred_fallthru
      _
    %v21 = vld [vmem:[%s0] sm:$0xff]
    %v22 = vld [vmem:[%s0 + $0x8] sm:$0xff]
    %v23 = vld [vmem:[%s1] sm:$0xff]
    %v24 = vld [vmem:[%s1 + $0x8] sm:$0xff]
    %v25 = vld [vmem:[%s1 + $0x10] sm:$0xff]
    %v26 = vld [vmem:[%s1 + $0x18] sm:$0xff]
    %v27 = vld [vmem:[%s1 + $0x20] sm:$0xff]
    %v28 = vld [vmem:[%s1 + $0x28] sm:$0xff]
    %v29 = vld [vmem:[%s1 + $0x30] sm:$0xff]
    %v30 = vld [vmem:[%s1 + $0x38] sm:$0xff]
    %v31 = vld [vmem:[%s1 + $0x40] sm:$0xff]
    %v32 = vld [vmem:[%s1 + $0x48] sm:$0xff]
    %v33 = vld [vmem:[%s1 + $0x50] sm:$0xff]
    %v34 = vld [vmem:[%s1 + $0x58] sm:$0xff]
    %v35 = vld [vmem:[%s1 + $0x60] sm:$0xff]
    %v36 = vld [vmem:[%s1 + $0x68] sm:$0xff]
    %v37 = vld [vmem:[%s1 + $0x70] sm:$0xff]
    %v38 = vld [vmem:[%s1 + $0x78] sm:$0xff]
    %v39 = vld [vmem:[%s2] sm:$0x1]
    %v41 = vlaneseq
    %v42 = vshrl.u32 %v41, 7
    %v43 = vsub.s32 0, %v42
    %v44 = vrot.slane %v39, %v43
    %46 = vmatprep.subr.mxu0 0.0
    %47 = vmatpush1.msra.mxu0 %v38
    %48 = vmatprep.subr.mxu0 0.0
    %49 = vmatpush1.msra.mxu0 %v37
    %50 = vmatprep.subr.mxu0 0.0
    %51 = vmatpush1.msra.mxu0 %v36
    %52 = vmatprep.subr.mxu0 0.0
    %53 = vmatpush1.msra.mxu0 %v35
    %54 = vmatprep.subr.mxu0 0.0
    %55 = vmatpush1.msra.mxu0 %v34
    %56 = vmatprep.subr.mxu0 0.0
    %57 = vmatpush1.msra.mxu0 %v33
    %58 = vmatprep.subr.mxu0 0.0
    %59 = vmatpush1.msra.mxu0 %v32
    %60 = vmatprep.subr.mxu0 0.0
    %61 = vmatpush1.msra.mxu0 %v31
    %62 = vmatprep.subr.mxu0 0.0
    %63 = vmatpush1.msra.mxu0 %v30
    %64 = vmatprep.subr.mxu0 0.0
    %65 = vmatpush1.msra.mxu0 %v29
    %66 = vmatprep.subr.mxu0 0.0
    %67 = vmatpush1.msra.mxu0 %v28
    %68 = vmatprep.subr.mxu0 0.0
    %69 = vmatpush1.msra.mxu0 %v27
    %70 = vmatprep.subr.mxu0 0.0
    %71 = vmatpush1.msra.mxu0 %v26
    %72 = vmatprep.subr.mxu0 0.0
    %73 = vmatpush1.msra.mxu0 %v25
    %74 = vmatprep.subr.mxu0 0.0
    %75 = vmatpush1.msra.mxu0 %v24
    %76 = vmatprep.subr.mxu0 0.0
    %77 = vmatpush1.msra.mxu0 %v23
    %78 = vmatprep.subr.mxu0 0.0
    %79 = vmatpush2.msra.mxu0 0.0
    %80 = vmatprep.subr.mxu0 0.0
    %81 = vmatpush2.msra.mxu0 0.0
    %82 = vmatprep.subr.mxu0 0.0
    %83 = vmatpush2.msra.mxu0 0.0
    %84 = vmatprep.subr.mxu0 0.0
    %85 = vmatpush2.msra.mxu0 0.0
    %86 = vmatprep.subr.mxu0 0.0
    %87 = vmatpush2.msra.mxu0 0.0
    %88 = vmatprep.subr.mxu0 0.0
    %89 = vmatpush2.msra.mxu0 0.0
    %90 = vmatprep.subr.mxu0 0.0
    %91 = vmatpush2.msra.mxu0 0.0
    %92 = vmatprep.subr.mxu0 0.0
    %93 = vmatpush2.msra.mxu0 0.0
    %94 = vmatprep.subr.mxu0 0.0
    %95 = vmatpush2.msra.mxu0 0.0
    %96 = vmatprep.subr.mxu0 0.0
    %97 = vmatpush2.msra.mxu0 0.0
    %98 = vmatprep.subr.mxu0 0.0
    %99 = vmatpush2.msra.mxu0 0.0
    %100 = vmatprep.subr.mxu0 0.0
    %101 = vmatpush2.msra.mxu0 0.0
    %102 = vmatprep.subr.mxu0 0.0
    %103 = vmatpush2.msra.mxu0 0.0
    %104 = vmatprep.subr.mxu0 0.0
    %105 = vmatpush2.msra.mxu0 0.0
    %106 = vmatprep.subr.mxu0 0.0
    %107 = vmatpush2.msra.mxu0 0.0
    %108 = vmatprep.subr.mxu0 0.0
    %109 = vmatpush2.msra.mxu0 0.0
    %110 = vmatprep.mubr.f32.mxu0 0.0
    %111 = vmatmul.mubr.f32.gmra.mxu0 %v21
    %v112 = vpop.f32.mrf.mxu0
    %v113 = vadd.f32 %v44, %v112
    %v114 = vpop.f32.mrf.mxu0
    %115 = vmatprep.mubr.f32.mxu0 0.0
    %116 = vmatmul.mubr.f32.gmra.mxu0 %v22
    %v117 = vpop.f32.mrf.mxu0
    %v118 = vadd.f32 %v44, %v117
    %v119 = vpop.f32.mrf.mxu0
    %120 = vdwg.mxu0
    %v121 = vmax.f32 %v113, 0.0
    %v122 = vmax.f32 %v118, 0.0
    %v123 = vld [vmem:[%s3] sm:$0xff]
    %v124 = vld [vmem:[%s3 + $0x8] sm:$0xff]
    %v125 = vld [vmem:[%s3 + $0x10] sm:$0xff]
    %v126 = vld [vmem:[%s3 + $0x18] sm:$0xff]
    %v127 = vld [vmem:[%s3 + $0x20] sm:$0xff]
    %v128 = vld [vmem:[%s3 + $0x28] sm:$0xff]
    %v129 = vld [vmem:[%s3 + $0x30] sm:$0xff]
    %v130 = vld [vmem:[%s3 + $0x38] sm:$0xff]
    %v131 = vld [vmem:[%s3 + $0x40] sm:$0xff]
    %v132 = vld [vmem:[%s3 + $0x48] sm:$0xff]
    %v133 = vld [vmem:[%s3 + $0x50] sm:$0xff]
    %v134 = vld [vmem:[%s3 + $0x58] sm:$0xff]
    %v135 = vld [vmem:[%s3 + $0x60] sm:$0xff]
    %v136 = vld [vmem:[%s3 + $0x68] sm:$0xff]
    %v137 = vld [vmem:[%s3 + $0x70] sm:$0xff]
    %v138 = vld [vmem:[%s3 + $0x78] sm:$0xff]
    %v139 = vld [vmem:[%s4] sm:$0x1]
    %v141 = vlaneseq
    %v142 = vshrl.u32 %v141, 7
    %v143 = vsub.s32 0, %v142
    %v144 = vrot.slane %v139, %v143
    %146 = vmatprep.subr.mxu0 0.0
    %147 = vmatpush1.msra.mxu0 %v138
    %148 = vmatprep.subr.mxu0 0.0
    %149 = vmatpush1.msra.mxu0 %v137
    %150 = vmatprep.subr.mxu0 0.0
    %151 = vmatpush1.msra.mxu0 %v136
    %152 = vmatprep.subr.mxu0 0.0
    %153 = vmatpush1.msra.mxu0 %v135
    %154 = vmatprep.subr.mxu0 0.0
    %155 = vmatpush1.msra.mxu0 %v134
    %156 = vmatprep.subr.mxu0 0.0
    %157 = vmatpush1.msra.mxu0 %v133
    %158 = vmatprep.subr.mxu0 0.0
    %159 = vmatpush1.msra.mxu0 %v132
    %160 = vmatprep.subr.mxu0 0.0
    %161 = vmatpush1.msra.mxu0 %v131
    %162 = vmatprep.subr.mxu0 0.0
    %163 = vmatpush1.msra.mxu0 %v130
    %164 = vmatprep.subr.mxu0 0.0
    %165 = vmatpush1.msra.mxu0 %v129
    %166 = vmatprep.subr.mxu0 0.0
    %167 = vmatpush1.msra.mxu0 %v128
    %168 = vmatprep.subr.mxu0 0.0
    %169 = vmatpush1.msra.mxu0 %v127
    %170 = vmatprep.subr.mxu0 0.0
    %171 = vmatpush1.msra.mxu0 %v126
    %172 = vmatprep.subr.mxu0 0.0
    %173 = vmatpush1.msra.mxu0 %v125
    %174 = vmatprep.subr.mxu0 0.0
    %175 = vmatpush1.msra.mxu0 %v124
    %176 = vmatprep.subr.mxu0 0.0
    %177 = vmatpush1.msra.mxu0 %v123
    %178 = vmatprep.subr.mxu0 0.0
    %179 = vmatpush2.msra.mxu0 0.0
    %180 = vmatprep.subr.mxu0 0.0
    %181 = vmatpush2.msra.mxu0 0.0
    %182 = vmatprep.subr.mxu0 0.0
    %183 = vmatpush2.msra.mxu0 0.0
    %184 = vmatprep.subr.mxu0 0.0
    %185 = vmatpush2.msra.mxu0 0.0
    %186 = vmatprep.subr.mxu0 0.0
    %187 = vmatpush2.msra.mxu0 0.0
    %188 = vmatprep.subr.mxu0 0.0
    %189 = vmatpush2.msra.mxu0 0.0
    %190 = vmatprep.subr.mxu0 0.0
    %191 = vmatpush2.msra.mxu0 0.0
    %192 = vmatprep.subr.mxu0 0.0
    %193 = vmatpush2.msra.mxu0 0.0
    %194 = vmatprep.subr.mxu0 0.0
    %195 = vmatpush2.msra.mxu0 0.0
    %196 = vmatprep.subr.mxu0 0.0
    %197 = vmatpush2.msra.mxu0 0.0
    %198 = vmatprep.subr.mxu0 0.0
    %199 = vmatpush2.msra.mxu0 0.0
    %200 = vmatprep.subr.mxu0 0.0
    %201 = vmatpush2.msra.mxu0 0.0
    %202 = vmatprep.subr.mxu0 0.0
    %203 = vmatpush2.msra.mxu0 0.0
    %204 = vmatprep.subr.mxu0 0.0
    %205 = vmatpush2.msra.mxu0 0.0
    %206 = vmatprep.subr.mxu0 0.0
    %207 = vmatpush2.msra.mxu0 0.0
    %208 = vmatprep.subr.mxu0 0.0
    %209 = vmatpush2.msra.mxu0 0.0
    %210 = vmatprep.mubr.f32.mxu0 0.0
    %211 = vmatmul.mubr.f32.gmra.mxu0 %v121
    %v212 = vpop.f32.mrf.mxu0
    %v213 = vadd.f32 %v144, %v212
    %v214 = vpop.f32.mrf.mxu0
    %215 = vmatprep.mubr.f32.mxu0 0.0
    %216 = vmatmul.mubr.f32.gmra.mxu0 %v122
    %v217 = vpop.f32.mrf.mxu0
    %v218 = vadd.f32 %v144, %v217
    %v219 = vpop.f32.mrf.mxu0
    %220 = vdwg.mxu0
    %221 = vst [vmem:[#allocation2] sm:$0xff] %v213
    %222 = vst [vmem:[#allocation2 + $0x8] sm:$0xff] %v218
    // Predicated region
    $region22: #{positionwise_ffn.1} parent=1 // pred_check
      _
    $region23: #{positionwise_ffn.1} parent=1 // pred_check_branch
      %224 = sbr.rel (0) target = $region25
    $region24: #{positionwise_ffn.1} parent=1 // pred_region
      %s226 = ssub.s32 256, 256
      %227 = vsyncadd [#allocation3], %s226
      %s228 = sshll.u32 [#allocation2], 4
      %s229 = int_to_ptr.vmem [resolvable:$true] %s228
      %234 = dma.vmem_to_hbm [thread:$0]  %s229, 256, %s5, [#allocation3], 128, 128, 8
    $region25: #{positionwise_ffn.1} parent=1 // pred_fallthru
      _
    // Predicated region
    $region26: #{positionwise_ffn.1} parent=1 // pred_check
      _
    $region27: #{positionwise_ffn.1} parent=1 // pred_check_branch
      %236 = sbr.rel (0) target = $region29
    $region28: #{positionwise_ffn.1} parent=1 // pred_region
      %237 = dma.done [#allocation3], 256
    $region29: #{positionwise_ffn.1} parent=1 // pred_fallthru
      _
    %238 = vsyncpa [#allocation3], 1

</llo_original>
